<compile_context>
chip_gen: v7x
topology: tpu7x:2x2x1
jax: 0.10.0
libtpu: 0.0.40
codegen_flags: <defaults>
</compile_context>

<pallas_src>
import jax
import jax.numpy as jnp
from jax.experimental import pallas as pl
from jax.experimental.pallas import tpu as pltpu


def _round_up(n, m):
    return ((n + m - 1) // m) * m


# ---------------------------------------------------------------------------
# Kernels
# ---------------------------------------------------------------------------
def _mlp_kernel_lane_dense(x_ref, wf_ref, bf_ref, w2t_ref, b2_ref, o_ref):
    """Fused MLP tile, lane-dense (1, tb) output row."""
    x = x_ref[...]                                                     # (tb, IN)
    # Folded hidden layers: tanh(x @ Wf + bf).   (MXU + EUP)
    h1 = jnp.tanh(
        jnp.dot(x, wf_ref[...], preferred_element_type=jnp.float32) + bf_ref[...]
    )                                                                  # (tb, H1)
    # Output projection fused with the batch->lane transpose:
    #   (1, H1) x (tb, H1)^T -> (1, tb)   (MXU NT matmul, q @ k.T pattern)
    yt = jax.lax.dot_general(
        w2t_ref[...], h1,
        dimension_numbers=(((1,), (1,)), ((), ())),
        preferred_element_type=jnp.float32,
    )                                                                  # (1, tb)
    o_ref[...] = jnp.maximum(yt + b2_ref[...], 0.0)


def _mlp_kernel_colmajor(x_ref, wf_ref, bf_ref, w2t_ref, b2_ref, o_ref):
    """Portability fallback: (tb, 1) output, final projection on the VPU."""
    x = x_ref[...]
    h1 = jnp.tanh(
        jnp.dot(x, wf_ref[...], preferred_element_type=jnp.float32) + bf_ref[...]
    )
    y = jnp.sum(h1 * w2t_ref[...], axis=-1, keepdims=True) + b2_ref[...]
    o_ref[...] = jnp.maximum(y, 0.0)


# ---------------------------------------------------------------------------
# Wrapper
# ---------------------------------------------------------------------------
def nn_forward(x, params, *, block_b=8192):
    """relu(tanh((X@W0+b0) @ W1 + b1) @ W2 + b2); dropout = identity (eval)."""
    w0, b0, w1, b1, w2, b2 = params
    B, in_size = x.shape
    h1_size = w1.shape[1]
    out_size = w2.shape[1]
    assert out_size == 1, "kernel specialised for the module's output_size=1"

    hp = jax.lax.Precision.HIGHEST
    # Fold the activation-free first layer into the second (trace-time math).
    wf = jnp.dot(w0, w1, precision=hp)             # (IN, H1)
    bf = jnp.dot(b0, w1, precision=hp) + b1        # (1, H1)
    w2t = w2.T                                     # (1, H1) row vector
    # b2 stays (1, 1)

    # Batch tile: multiple of 128 (lane-dense stores), capped at block_b, and
    # chosen to give a >= 2-step grid whenever B > 128 (v7x megacore sharding).
    block_b = max(128, _round_up(block_b, 128))
    tb = max(128, min(block_b, _round_up(pl.cdiv(B, 2), 128)))
    b_pad = _round_up(B, tb)
    x_p = jnp.pad(x, ((0, b_pad - B), (0, 0))) if b_pad != B else x
    grid = (b_pad // tb,)

    x_spec = pl.BlockSpec((tb, in_size), lambda i: (i, 0))

    def resident(a):  # weights/biases: constant index_map -> VMEM-resident
        return pl.BlockSpec(a.shape, lambda i: (0, 0))

    in_specs = [x_spec, resident(wf), resident(bf), resident(w2t), resident(b2)]
    args = (x_p, wf, bf, w2t, b2)

    compiler_params = pltpu.CompilerParams(dimension_semantics=("parallel",))
    cost = pl.CostEstimate(
        flops=2 * b_pad * (in_size * h1_size + h1_size * out_size),
        transcendentals=b_pad * h1_size,
        bytes_accessed=4 * (b_pad * (in_size + out_size)
                            + int(wf.size) + int(bf.size)
                            + int(w2t.size) + int(b2.size)),
    )

    # Primary path: lane-dense (1, tb) output blocks of a (1, B_pad) slab.
    try:
        out_row = pl.pallas_call(
            _mlp_kernel_lane_dense,
            out_shape=jax.ShapeDtypeStruct((1, b_pad), jnp.float32),
            grid=grid,
            in_specs=in_specs,
            out_specs=pl.BlockSpec((1, tb), lambda i: (0, i)),
            compiler_params=compiler_params,
            cost_estimate=cost,
        )(*args)
        out_row = jax.block_until_ready(out_row)
        return out_row[0, :B, None]                      # -> (B, 1)
    except Exception:
        # Fallback for Mosaic versions that reject the NT-matmul / lane-dense
        # store path.  Same math; width-1 (masked-store) output blocks.
        pass

    out = pl.pallas_call(
        _mlp_kernel_colmajor,
        out_shape=jax.ShapeDtypeStruct((b_pad, out_size), jnp.float32),
        grid=grid,
        in_specs=in_specs,
        out_specs=pl.BlockSpec((tb, out_size), lambda i: (i, 0)),
        compiler_params=compiler_params,
        cost_estimate=cost,
    )(*args)
    return out[:B]


# ---------------------------------------------------------------------------
# Init + pure-JAX reference (unfolded math, mirrors the PyTorch module)
# ---------------------------------------------------------------------------
def init_params(key, input_size=24, hidden_sizes=(20, 5), output_size=1):
    """Deterministic init mimicking nn.Linear (uniform +/- 1/sqrt(fan_in))."""
    sizes = [input_size, *hidden_sizes, output_size]
    params = []
    for fan_in, fan_out in zip(sizes[:-1], sizes[1:]):
        key, kw, kb = jax.random.split(key, 3)
        bound = 1.0 / jnp.sqrt(jnp.float32(fan_in))
        w = jax.random.uniform(kw, (fan_in, fan_out), jnp.float32, -bound, bound)
        b = jax.random.uniform(kb, (1, fan_out), jnp.float32, -bound, bound)
        params += [w, b]
    return tuple(params)


def reference_forward(x, params):
    w0, b0, w1, b1, w2, b2 = params
    hp = jax.lax.Precision.HIGHEST
    h0 = jnp.dot(x, w0, precision=hp) + b0                  # even layer: no activation
    h1 = jnp.tanh(jnp.dot(h0, w1, precision=hp) + b1)       # odd layer: tanh
    return jnp.maximum(jnp.dot(h1, w2, precision=hp) + b2, 0.0)


if __name__ == "__main__":
    key = jax.random.PRNGKey(0)
    key, kx1, kx2, kx3 = jax.random.split(key, 4)

    input_size = 24
    params = init_params(key, input_size=input_size)

    # Case 1: two-tile grid (exercises the parallel batch axis / multi-step grid).
    x1 = jax.random.normal(kx1, (256, input_size), jnp.float32)
    out1 = jax.block_until_ready(nn_forward(x1, params))
    assert out1.shape == (256, 1)
    assert jnp.allclose(out1, reference_forward(x1, params), atol=1e-4, rtol=1e-4)

    # Case 2: small, non-tile-multiple batch (exercises the padding path).
    x2 = jax.random.normal(kx2, (20, input_size), jnp.float32)
    out2 = jax.block_until_ready(nn_forward(x2, params))
    assert out2.shape == (20, 1)
    assert jnp.allclose(out2, reference_forward(x2, params), atol=1e-4, rtol=1e-4)

    # Case 3: uneven multi-tile batch with a non-default tile size.
    x3 = jax.random.normal(kx3, (600, input_size), jnp.float32)
    out3 = jax.block_until_ready(nn_forward(x3, params, block_b=256))
    assert out3.shape == (600, 1)
    assert jnp.allclose(out3, reference_forward(x3, params), atol=1e-4, rtol=1e-4)

    print("KERNEL_OK")
</pallas_src>

<mosaic_0001>
module attributes {stable_mosaic.version = 11 : i64} {
  func.func @_mlp_kernel_lane_dense(%arg0: i32, %arg1: memref<128x24xf32, #tpu.memory_space<vmem>>, %arg2: memref<24x5xf32, #tpu.memory_space<vmem>>, %arg3: memref<1x5xf32, #tpu.memory_space<vmem>>, %arg4: memref<1x5xf32, #tpu.memory_space<vmem>>, %arg5: memref<1x1xf32, #tpu.memory_space<vmem>>, %arg6: memref<1x128xf32, #tpu.memory_space<vmem>>) attributes {dimension_semantics = [#tpu.dimension_semantics<parallel>], iteration_bounds = array<i64: 2>, scalar_prefetch = 0 : i64, scratch_operands = 0 : i64, tpu.core_type = #tpu.core_type<tc>, window_params = [{transform_indices = @transform_0, window_bounds = array<i64: 128, 24>}, {pipeline_mode = #tpu.pipeline_mode<synchronous>, transform_indices = @transform_1, window_bounds = array<i64: 24, 5>}, {pipeline_mode = #tpu.pipeline_mode<synchronous>, transform_indices = @transform_2, window_bounds = array<i64: 1, 5>}, {pipeline_mode = #tpu.pipeline_mode<synchronous>, transform_indices = @transform_3, window_bounds = array<i64: 1, 5>}, {pipeline_mode = #tpu.pipeline_mode<synchronous>, transform_indices = @transform_4, window_bounds = array<i64: 1, 1>}, {transform_indices = @transform_5, window_bounds = array<i64: 1, 128>}]} {
    %c0 = arith.constant 0 : index
    %c0_0 = arith.constant 0 : index
    %0 = vector.load %arg1[%c0, %c0_0] : memref<128x24xf32, #tpu.memory_space<vmem>>, vector<128x24xf32>
    %c0_1 = arith.constant 0 : index
    %c0_2 = arith.constant 0 : index
    %1 = vector.load %arg2[%c0_1, %c0_2] : memref<24x5xf32, #tpu.memory_space<vmem>>, vector<24x5xf32>
    %cst = arith.constant dense<0.000000e+00> : vector<128x5xf32>
    %2 = tpu.matmul %0, %1, %cst {dimension_numbers = #tpu.dot_dimension_numbers<[1], [0], [0], [1], [0, 0, 1, 1], [], []>} : vector<128x24xf32>, vector<24x5xf32>, vector<128x5xf32> -> vector<128x5xf32>
    %c0_3 = arith.constant 0 : index
    %c0_4 = arith.constant 0 : index
    %3 = vector.load %arg3[%c0_3, %c0_4] : memref<1x5xf32, #tpu.memory_space<vmem>>, vector<1x5xf32>
    %4 = vector.broadcast %3 : vector<1x5xf32> to vector<128x5xf32>
    %5 = arith.addf %2, %4 : vector<128x5xf32>
    %6 = math.tanh %5 : vector<128x5xf32>
    %c0_5 = arith.constant 0 : index
    %c0_6 = arith.constant 0 : index
    %7 = vector.load %arg4[%c0_5, %c0_6] : memref<1x5xf32, #tpu.memory_space<vmem>>, vector<1x5xf32>
    %cst_7 = arith.constant dense<0.000000e+00> : vector<1x128xf32>
    %8 = tpu.matmul %7, %6, %cst_7 {dimension_numbers = #tpu.dot_dimension_numbers<[1], [1], [0], [0], [0, 0, 1, 0], [], []>} : vector<1x5xf32>, vector<128x5xf32>, vector<1x128xf32> -> vector<1x128xf32>
    %c0_8 = arith.constant 0 : index
    %c0_9 = arith.constant 0 : index
    %9 = vector.load %arg5[%c0_8, %c0_9] : memref<1x1xf32, #tpu.memory_space<vmem>>, vector<1x1xf32>
    %10 = vector.broadcast %9 : vector<1x1xf32> to vector<1x128xf32>
    %11 = arith.addf %8, %10 : vector<1x128xf32>
    %cst_10 = arith.constant 0.000000e+00 : f32
    %12 = vector.broadcast %cst_10 : f32 to vector<1x128xf32>
    %13 = arith.maximumf %11, %12 : vector<1x128xf32>
    %c0_11 = arith.constant 0 : index
    %c0_12 = arith.constant 0 : index
    %14 = vector.load %arg6[%c0_11, %c0_12] : memref<1x128xf32, #tpu.memory_space<vmem>>, vector<1x128xf32>
    tpu.vector_store %arg6[%c0_11, %c0_12], %13 {strides = array<i32>} : memref<1x128xf32, #tpu.memory_space<vmem>>, vector<1x128xf32>,
    return
  }
  func.func @transform_0(%arg0: i32) -> (i32, i32) {
    %c0_i32 = arith.constant 0 : i32
    %c0_i32_0 = arith.constant 0 : i32
    return %arg0, %c0_i32 : i32, i32
  }
  func.func @transform_1(%arg0: i32) -> (i32, i32) {
    %c0_i32 = arith.constant 0 : i32
    %c0_i32_0 = arith.constant 0 : i32
    %c0_i32_1 = arith.constant 0 : i32
    return %c0_i32, %c0_i32_0 : i32, i32
  }
  func.func @transform_2(%arg0: i32) -> (i32, i32) {
    %c0_i32 = arith.constant 0 : i32
    %c0_i32_0 = arith.constant 0 : i32
    %c0_i32_1 = arith.constant 0 : i32
    return %c0_i32, %c0_i32_0 : i32, i32
  }
  func.func @transform_3(%arg0: i32) -> (i32, i32) {
    %c0_i32 = arith.constant 0 : i32
    %c0_i32_0 = arith.constant 0 : i32
    %c0_i32_1 = arith.constant 0 : i32
    return %c0_i32, %c0_i32_0 : i32, i32
  }
  func.func @transform_4(%arg0: i32) -> (i32, i32) {
    %c0_i32 = arith.constant 0 : i32
    %c0_i32_0 = arith.constant 0 : i32
    %c0_i32_1 = arith.constant 0 : i32
    return %c0_i32, %c0_i32_0 : i32, i32
  }
  func.func @transform_5(%arg0: i32) -> (i32, i32) {
    %c0_i32 = arith.constant 0 : i32
    %c0_i32_0 = arith.constant 0 : i32
    return %c0_i32, %arg0 : i32, i32
  }
}

module attributes {stable_mosaic.version = 11 : i64} {
  func.func @_mlp_kernel_colmajor(%arg0: i32, %arg1: memref<128x24xf32, #tpu.memory_space<vmem>>, %arg2: memref<24x5xf32, #tpu.memory_space<vmem>>, %arg3: memref<1x5xf32, #tpu.memory_space<vmem>>, %arg4: memref<1x5xf32, #tpu.memory_space<vmem>>, %arg5: memref<1x1xf32, #tpu.memory_space<vmem>>, %arg6: memref<128x1xf32, #tpu.memory_space<vmem>>) attributes {dimension_semantics = [#tpu.dimension_semantics<parallel>], iteration_bounds = array<i64: 2>, scalar_prefetch = 0 : i64, scratch_operands = 0 : i64, tpu.core_type = #tpu.core_type<tc>, window_params = [{transform_indices = @transform_0, window_bounds = array<i64: 128, 24>}, {pipeline_mode = #tpu.pipeline_mode<synchronous>, transform_indices = @transform_1, window_bounds = array<i64: 24, 5>}, {pipeline_mode = #tpu.pipeline_mode<synchronous>, transform_indices = @transform_2, window_bounds = array<i64: 1, 5>}, {pipeline_mode = #tpu.pipeline_mode<synchronous>, transform_indices = @transform_3, window_bounds = array<i64: 1, 5>}, {pipeline_mode = #tpu.pipeline_mode<synchronous>, transform_indices = @transform_4, window_bounds = array<i64: 1, 1>}, {transform_indices = @transform_5, window_bounds = array<i64: 128, 1>}]} {
    %c0 = arith.constant 0 : index
    %c0_0 = arith.constant 0 : index
    %0 = vector.load %arg1[%c0, %c0_0] : memref<128x24xf32, #tpu.memory_space<vmem>>, vector<128x24xf32>
    %c0_1 = arith.constant 0 : index
    %c0_2 = arith.constant 0 : index
    %1 = vector.load %arg2[%c0_1, %c0_2] : memref<24x5xf32, #tpu.memory_space<vmem>>, vector<24x5xf32>
    %cst = arith.constant dense<0.000000e+00> : vector<128x5xf32>
    %2 = tpu.matmul %0, %1, %cst {dimension_numbers = #tpu.dot_dimension_numbers<[1], [0], [0], [1], [0, 0, 1, 1], [], []>} : vector<128x24xf32>, vector<24x5xf32>, vector<128x5xf32> -> vector<128x5xf32>
    %c0_3 = arith.constant 0 : index
    %c0_4 = arith.constant 0 : index
    %3 = vector.load %arg3[%c0_3, %c0_4] : memref<1x5xf32, #tpu.memory_space<vmem>>, vector<1x5xf32>
    %4 = vector.broadcast %3 : vector<1x5xf32> to vector<128x5xf32>
    %5 = arith.addf %2, %4 : vector<128x5xf32>
    %6 = math.tanh %5 : vector<128x5xf32>
    %c0_5 = arith.constant 0 : index
    %c0_6 = arith.constant 0 : index
    %7 = vector.load %arg4[%c0_5, %c0_6] : memref<1x5xf32, #tpu.memory_space<vmem>>, vector<1x5xf32>
    %8 = vector.broadcast %7 : vector<1x5xf32> to vector<128x5xf32>
    %9 = arith.mulf %6, %8 : vector<128x5xf32>
    %cst_7 = arith.constant dense<0.000000e+00> : vector<128xf32>
    %10 = vector.multi_reduction <add>, %9, %cst_7 [1] : vector<128x5xf32> to vector<128xf32>
    %11 = vector.shape_cast %10 : vector<128xf32> to vector<128x1xf32>
    %c0_8 = arith.constant 0 : index
    %c0_9 = arith.constant 0 : index
    %12 = vector.load %arg5[%c0_8, %c0_9] : memref<1x1xf32, #tpu.memory_space<vmem>>, vector<1x1xf32>
    %13 = vector.broadcast %12 : vector<1x1xf32> to vector<128x1xf32>
    %14 = arith.addf %11, %13 : vector<128x1xf32>
    %cst_10 = arith.constant 0.000000e+00 : f32
    %15 = vector.broadcast %cst_10 : f32 to vector<128x1xf32>
    %16 = arith.maximumf %14, %15 : vector<128x1xf32>
    %c0_11 = arith.constant 0 : index
    %c0_12 = arith.constant 0 : index
    %17 = vector.load %arg6[%c0_11, %c0_12] : memref<128x1xf32, #tpu.memory_space<vmem>>, vector<128x1xf32>
    tpu.vector_store %arg6[%c0_11, %c0_12], %16 {strides = array<i32>} : memref<128x1xf32, #tpu.memory_space<vmem>>, vector<128x1xf32>,
    return
  }
  func.func @transform_0(%arg0: i32) -> (i32, i32) {
    %c0_i32 = arith.constant 0 : i32
    %c0_i32_0 = arith.constant 0 : i32
    return %arg0, %c0_i32 : i32, i32
  }
  func.func @transform_1(%arg0: i32) -> (i32, i32) {
    %c0_i32 = arith.constant 0 : i32
    %c0_i32_0 = arith.constant 0 : i32
    %c0_i32_1 = arith.constant 0 : i32
    return %c0_i32, %c0_i32_0 : i32, i32
  }
  func.func @transform_2(%arg0: i32) -> (i32, i32) {
    %c0_i32 = arith.constant 0 : i32
    %c0_i32_0 = arith.constant 0 : i32
    %c0_i32_1 = arith.constant 0 : i32
    return %c0_i32, %c0_i32_0 : i32, i32
  }
  func.func @transform_3(%arg0: i32) -> (i32, i32) {
    %c0_i32 = arith.constant 0 : i32
    %c0_i32_0 = arith.constant 0 : i32
    %c0_i32_1 = arith.constant 0 : i32
    return %c0_i32, %c0_i32_0 : i32, i32
  }
  func.func @transform_4(%arg0: i32) -> (i32, i32) {
    %c0_i32 = arith.constant 0 : i32
    %c0_i32_0 = arith.constant 0 : i32
    %c0_i32_1 = arith.constant 0 : i32
    return %c0_i32, %c0_i32_0 : i32, i32
  }
  func.func @transform_5(%arg0: i32) -> (i32, i32) {
    %c0_i32 = arith.constant 0 : i32
    %c0_i32_0 = arith.constant 0 : i32
    return %arg0, %c0_i32 : i32, i32
  }
}

</mosaic_0001>

<llo_original>
// kernel: tpu_custom_call.1
$region0: #{tpu_custom_call.1}
  #allocation0 [shape = 'u32[]', space=smem, size = 0x4, offset = 0x4, fixed_abs, tag = 'smem constant byte address 0x4 - core index']
  #allocation1 [shape = 'u32[144,128]{1,0:T(1,128)}', space=vmem, size = 0x12000, scoped, tag = 'internal scratch']
  #allocation2 [shape = 'f32[1,1]{1,0:T(1,128)S(1)}', space=vmem, size = 0x200, scoped, tag = 'scoped memory for tpu_custom_call.1']
  %s0 = inlined_call_operand.vmem [shape: f32[256,24], index: 0, kind: input, shape index: {}]
  %s1 = inlined_call_operand.vmem [shape: f32[24,5], index: 1, kind: input, shape index: {}]
  %s2 = inlined_call_operand.vmem [shape: f32[1,5], index: 2, kind: input, shape index: {}]
  %s3 = inlined_call_operand.vmem [shape: f32[1,5], index: 3, kind: input, shape index: {}]
  %s4 = inlined_call_operand.<no memory space> [shape: f32[1,1], index: 4, kind: input, shape index: {}]
  %s5 = inlined_call_operand.hbm [shape: f32[1,256], index: 5, kind: output, shape index: {}]
  %s6 = sld [smem:[#allocation0]]
  $region53: #{tpu_custom_call.1} parent=0
    _
  %s8 = ssub.s32 1, %s6
  %s9 = scalar_select 0, %s8, %s6
  %v10 = vstv %s4
  %11 = vst [vmem:[#allocation2] sm:$0x1] %v10
  $region1: #{tpu_custom_call.1} parent=0
    #allocation3 [shape = 'u8[1024]{0}', space=vmem, size = 0x400, scoped, tag = 'output window, operand 0']
    #allocation4 [shape = 's32[2]{0}', space=sflag, size = 0x8, scoped, tag = 'scoped memory for tpu_custom_call.1']
    %12 = vsyncpa [#allocation4], 0
    %s13 = scalar_lea.sflag [#allocation4], 1
    %14 = vsyncpa %s13, 0
    loop: start=0, step=1, limit=4
    $region2: #{tpu_custom_call.1} parent=1 // loop_pre_header
      _
    $region3: #{tpu_custom_call.1} parent=1 // loop_header
      %s16 = sphi 0, %s20
      %p17 = scmp.ge.s32.totalorder %s16, 4
      %s26 = sphi 0, %s28
      %s29 = sphi 0, %s26
      %s30 = sphi 0, %s29
      %s46 = sphi 0, %s30
      %s50 = sphi 0, %s50
      %s52 = sphi 0, %s50
      %s53 = sphi 0, %s52
      %s67 = sphi 0, %s53
      %s71 = sphi 0, %s71
      %s73 = sphi 0, %s71
      %s74 = sphi 0, %s73
      %s88 = sphi 0, %s74
      %s92 = sphi 0, %s92
      %s94 = sphi 0, %s92
      %s95 = sphi 0, %s94
      %s109 = sphi 0, %s95
      %s113 = sphi 0, %s113
      %s115 = sphi 0, %s113
      %s116 = sphi 0, %s115
      %s130 = sphi 0, %s116
      %s136 = sphi 0, %s138
      %s139 = sphi 0, %s136
      %s140 = sphi 0, %s139
      %s156 = sphi 0, %s140
    $region4: #{tpu_custom_call.1} parent=1 // loop_header_branch
      %19 = sbr.rel (%p17) target = $region8
    $region5: #{tpu_custom_call.1} parent=1 // loop_body
      %s21 = ssub.s32 %s16, 1
      %s22 = ssub.s32 %s16, 2
      %s23 = sadd.s32 %s16, 1
      %s24 = ssub.s32 %s16, %s23
      %p25 = scmp.eq.s32.totalorder %s24, 0
      %s27 = sadd.s32 %s26, 1
      %s28 = scalar_select %p25, %s26, %s27
      %p31 = pneg %p25
      %p32 = scmp.eq.s32.totalorder %s16, 1
      %p33 = por %p31, %p32
      %p34 = scmp.ne.s32.totalorder %s26, %s29
      %p35 = scmp.eq.s32.totalorder %s16, 0
      %p36 = por %p34, %p35
      %p37 = scmp.ne.s32.totalorder %s26, %s29
      %p38 = scmp.eq.s32.totalorder %s21, 1
      %p39 = por %p37, %p38
      %p40 = scmp.ne.s32.totalorder %s29, %s30
      %p41 = scmp.eq.s32.totalorder %s21, 0
      %p42 = por %p40, %p41
      %p43 = scmp.ne.s32.totalorder %s29, %s30
      %p44 = scmp.eq.s32.totalorder %s22, 1
      %p45 = por %p43, %p44
      %p47 = scmp.ne.s32.totalorder %s30, %s46
      %p48 = scmp.eq.s32.totalorder %s22, 0
      %p49 = por %p47, %p48
      %s51 = sadd.s32 %s50, 1
      %p54 = scmp.eq.s32.totalorder %s16, 1
      %p55 = scmp.ne.s32.totalorder %s50, %s52
      %p56 = scmp.eq.s32.totalorder %s16, 0
      %p57 = por %p55, %p56
      %p58 = scmp.ne.s32.totalorder %s50, %s52
      %p59 = scmp.eq.s32.totalorder %s21, 1
      %p60 = por %p58, %p59
      %p61 = scmp.ne.s32.totalorder %s52, %s53
      %p62 = scmp.eq.s32.totalorder %s21, 0
      %p63 = por %p61, %p62
      %p64 = scmp.ne.s32.totalorder %s52, %s53
      %p65 = scmp.eq.s32.totalorder %s22, 1
      %p66 = por %p64, %p65
      %p68 = scmp.ne.s32.totalorder %s53, %s67
      %p69 = scmp.eq.s32.totalorder %s22, 0
      %p70 = por %p68, %p69
      %s72 = sadd.s32 %s71, 1
      %p75 = scmp.eq.s32.totalorder %s16, 1
      %p76 = scmp.ne.s32.totalorder %s71, %s73
      %p77 = scmp.eq.s32.totalorder %s16, 0
      %p78 = por %p76, %p77
      %p79 = scmp.ne.s32.totalorder %s71, %s73
      %p80 = scmp.eq.s32.totalorder %s21, 1
      %p81 = por %p79, %p80
      %p82 = scmp.ne.s32.totalorder %s73, %s74
      %p83 = scmp.eq.s32.totalorder %s21, 0
      %p84 = por %p82, %p83
      %p85 = scmp.ne.s32.totalorder %s73, %s74
      %p86 = scmp.eq.s32.totalorder %s22, 1
      %p87 = por %p85, %p86
      %p89 = scmp.ne.s32.totalorder %s74, %s88
      %p90 = scmp.eq.s32.totalorder %s22, 0
      %p91 = por %p89, %p90
      %s93 = sadd.s32 %s92, 1
      %p96 = scmp.eq.s32.totalorder %s16, 1
      %p97 = scmp.ne.s32.totalorder %s92, %s94
      %p98 = scmp.eq.s32.totalorder %s16, 0
      %p99 = por %p97, %p98
      %p100 = scmp.ne.s32.totalorder %s92, %s94
      %p101 = scmp.eq.s32.totalorder %s21, 1
      %p102 = por %p100, %p101
      %p103 = scmp.ne.s32.totalorder %s94, %s95
      %p104 = scmp.eq.s32.totalorder %s21, 0
      %p105 = por %p103, %p104
      %p106 = scmp.ne.s32.totalorder %s94, %s95
      %p107 = scmp.eq.s32.totalorder %s22, 1
      %p108 = por %p106, %p107
      %p110 = scmp.ne.s32.totalorder %s95, %s109
      %p111 = scmp.eq.s32.totalorder %s22, 0
      %p112 = por %p110, %p111
      %s114 = sadd.s32 %s113, 1
      %p117 = scmp.eq.s32.totalorder %s16, 1
      %p118 = scmp.ne.s32.totalorder %s113, %s115
      %p119 = scmp.eq.s32.totalorder %s16, 0
      %p120 = por %p118, %p119
      %p121 = scmp.ne.s32.totalorder %s113, %s115
      %p122 = scmp.eq.s32.totalorder %s21, 1
      %p123 = por %p121, %p122
      %p124 = scmp.ne.s32.totalorder %s115, %s116
      %p125 = scmp.eq.s32.totalorder %s21, 0
      %p126 = por %p124, %p125
      %p127 = scmp.ne.s32.totalorder %s115, %s116
      %p128 = scmp.eq.s32.totalorder %s22, 1
      %p129 = por %p127, %p128
      %p131 = scmp.ne.s32.totalorder %s116, %s130
      %p132 = scmp.eq.s32.totalorder %s22, 0
      %p133 = por %p131, %p132
      %s134 = ssub.s32 %s16, %s23
      %p135 = scmp.eq.s32.totalorder %s134, 0
      %s137 = sadd.s32 %s136, 1
      %s138 = scalar_select %p135, %s136, %s137
      %p141 = pneg %p135
      %p142 = scmp.eq.s32.totalorder %s16, 1
      %p143 = por %p141, %p142
      %p144 = scmp.ne.s32.totalorder %s136, %s139
      %p145 = scmp.eq.s32.totalorder %s16, 0
      %p146 = por %p144, %p145
      %p147 = scmp.ne.s32.totalorder %s136, %s139
      %p148 = scmp.eq.s32.totalorder %s21, 1
      %p149 = por %p147, %p148
      %p150 = scmp.ne.s32.totalorder %s139, %s140
      %p151 = scmp.eq.s32.totalorder %s21, 0
      %p152 = por %p150, %p151
      %p153 = scmp.ne.s32.totalorder %s139, %s140
      %p154 = scmp.eq.s32.totalorder %s22, 1
      %p155 = por %p153, %p154
      %p157 = scmp.ne.s32.totalorder %s140, %s156
      %p158 = scmp.eq.s32.totalorder %s22, 0
      %p159 = por %p157, %p158
      %p160 = scmp.le.s32.totalorder 1, %s16
      %p161 = scmp.lt.s32.totalorder %s16, 3
      %p162 = pnand %p160, %p161
      %p163 = pneg %p162
      // Predicated region
      $region9: #{tpu_custom_call.1} parent=5 // pred_check
        _
      $region10: #{tpu_custom_call.1} parent=5 // pred_check_branch
        %165 = sbr.rel (%p162) target = $region12
      $region11: #{tpu_custom_call.1} parent=5 // pred_region
        %s166 = ssub.s32 %s16, 1
        // Predicated region
        $region13: #{tpu_custom_call.1} parent=11 // pred_check
          %p167 = pneg %p63
        $region14: #{tpu_custom_call.1} parent=11 // pred_check_branch
          %169 = sbr.rel (%p167) target = $region16
        $region15: #{tpu_custom_call.1} parent=11 // pred_region
          _
        $region16: #{tpu_custom_call.1} parent=11 // pred_fallthru
          _
        // Predicated region
        $region17: #{tpu_custom_call.1} parent=11 // pred_check
          %p170 = pneg %p84
        $region18: #{tpu_custom_call.1} parent=11 // pred_check_branch
          %172 = sbr.rel (%p170) target = $region20
        $region19: #{tpu_custom_call.1} parent=11 // pred_region
          _
        $region20: #{tpu_custom_call.1} parent=11 // pred_fallthru
          _
        // Predicated region
        $region21: #{tpu_custom_call.1} parent=11 // pred_check
          %p173 = pneg %p105
        $region22: #{tpu_custom_call.1} parent=11 // pred_check_branch
          %175 = sbr.rel (%p173) target = $region24
        $region23: #{tpu_custom_call.1} parent=11 // pred_region
          _
        $region24: #{tpu_custom_call.1} parent=11 // pred_fallthru
          _
        // Predicated region
        $region25: #{tpu_custom_call.1} parent=11 // pred_check
          %p176 = pneg %p126
        $region26: #{tpu_custom_call.1} parent=11 // pred_check_branch
          %178 = sbr.rel (%p176) target = $region28
        $region27: #{tpu_custom_call.1} parent=11 // pred_region
          _
        $region28: #{tpu_custom_call.1} parent=11 // pred_fallthru
          _
      $region12: #{tpu_custom_call.1} parent=5 // pred_fallthru
        _
      %p179 = scmp.lt.s32.totalorder %s16, 2
      // Predicated region
      $region29: #{tpu_custom_call.1} parent=5 // pred_check
        %p180 = pneg %p179
      $region30: #{tpu_custom_call.1} parent=5 // pred_check_branch
        %182 = sbr.rel (%p180) target = $region32
      $region31: #{tpu_custom_call.1} parent=5 // pred_region
        // Predicated region
        $region33: #{tpu_custom_call.1} parent=31 // pred_check
          %p183 = pneg %p36
        $region34: #{tpu_custom_call.1} parent=31 // pred_check_branch
          %185 = sbr.rel (%p183) target = $region36
        $region35: #{tpu_custom_call.1} parent=31 // pred_region
          %s186 = smul.u32 16, %s16
          %p187 = scmp.lt.s32.totalorder %s186, 31
          %s188 = scalar_select %p187, %s186, 31
          %s189 = smul.addr %s188, 8
          %s190 = scalar_lea.vmem %s0, %s189
          %s191 = smul.u32 16, %s16
        $region36: #{tpu_custom_call.1} parent=31 // pred_fallthru
          _
      $region32: #{tpu_custom_call.1} parent=5 // pred_fallthru
        _
      %p192 = scmp.le.s32.totalorder 1, %s16
      %p193 = scmp.lt.s32.totalorder %s16, 3
      %p194 = pnand %p192, %p193
      %p195 = pneg %p194
      // Predicated region
      $region37: #{tpu_custom_call.1} parent=5 // pred_check
        _
      $region38: #{tpu_custom_call.1} parent=5 // pred_check_branch
        %197 = sbr.rel (%p194) target = $region40
      $region39: #{tpu_custom_call.1} parent=5 // pred_region
        %s198 = ssub.s32 %s16, 1
        %s199 = smul.u32 16, %s21
        %p200 = scmp.lt.s32.totalorder %s199, 31
        %s201 = scalar_select %p200, %s199, 31
        %s202 = smul.addr %s201, 8
        %s203 = scalar_lea.vmem %s0, %s202
        %p204 = pneg %p42
        %p205 = pneg %p39
        %p206 = pneg %p63
        %p207 = pneg %p60
        %p208 = pneg %p84
        %p209 = pneg %p81
        %p210 = pneg %p105
        %p211 = pneg %p102
        %p212 = pneg %p126
        %p213 = pneg %p123
        %p214 = pneg %p152
        %p215 = pneg %p149
        %s216 = sand.u32 %s139, 1
        %s217 = scalar_lea.sflag [#allocation4], %s216
        %s218 = sand.u32 %s139, 1
        %s219 = scalar_lea.vmem [#allocation3], %s218
        %s220 = smul.u32 16, %s21
        %p221 = scmp.lt.s32.totalorder %s220, 31
        %s222 = scalar_select %p221, %s220, 31
        %s223 = smul.addr %s222, 8
        %s224 = scalar_lea.vmem %s0, %s223
        %s225 = smul.u32 16, %s21
        %v226 = vld [vmem:[%s224] sm:$0xff]
        %v227 = vld [vmem:[%s224 + $0x8] sm:$0xff]
        %v228 = vld [vmem:[%s224 + $0x10] sm:$0xff]
        %v229 = vld [vmem:[%s224 + $0x18] sm:$0xff]
        %v230 = vld [vmem:[%s224 + $0x20] sm:$0xff]
        %v231 = vld [vmem:[%s224 + $0x28] sm:$0xff]
        %v232 = vld [vmem:[%s224 + $0x30] sm:$0xff]
        %v233 = vld [vmem:[%s224 + $0x38] sm:$0xff]
        %v234 = vld [vmem:[%s224 + $0x40] sm:$0xff]
        %v235 = vld [vmem:[%s224 + $0x48] sm:$0xff]
        %v236 = vld [vmem:[%s224 + $0x50] sm:$0xff]
        %v237 = vld [vmem:[%s224 + $0x58] sm:$0xff]
        %v238 = vld [vmem:[%s224 + $0x60] sm:$0xff]
        %v239 = vld [vmem:[%s224 + $0x68] sm:$0xff]
        %v240 = vld [vmem:[%s224 + $0x70] sm:$0xff]
        %v241 = vld [vmem:[%s224 + $0x78] sm:$0xff]
        %v242 = vld [vmem:[%s1] sm:$0xff]
        %v243 = vld [vmem:[%s1 + $0x8] sm:$0xff]
        %v244 = vld [vmem:[%s1 + $0x10] sm:$0xff]
        %v245 = vld [vmem:[%s2] sm:$0x1]
        %v247 = vlaneseq
        %v248 = vshrl.u32 %v247, 7
        %v249 = vsub.s32 0, %v248
        %v250 = vrot.slane %v245, %v249
        %vm252 = vcmask 195584
        %v254 = vsel %vm252, %v226, 0
        %v257 = vsel %vm252, %v227, 0
        %v260 = vsel %vm252, %v228, 0
        %v263 = vsel %vm252, %v229, 0
        %v266 = vsel %vm252, %v230, 0
        %v269 = vsel %vm252, %v231, 0
        %v272 = vsel %vm252, %v232, 0
        %v275 = vsel %vm252, %v233, 0
        %v278 = vsel %vm252, %v234, 0
        %v281 = vsel %vm252, %v235, 0
        %v284 = vsel %vm252, %v236, 0
        %v287 = vsel %vm252, %v237, 0
        %v290 = vsel %vm252, %v238, 0
        %v293 = vsel %vm252, %v239, 0
        %v296 = vsel %vm252, %v240, 0
        %v299 = vsel %vm252, %v241, 0
        %301 = vmatprep.subr.mxu0 0.0
        %302 = vmatpush1.msra.mxu0 %v242
        %303 = vmatprep.subr.mxu0 0.0
        %304 = vmatpush1.msra.mxu0 %v243
        %305 = vmatprep.subr.mxu0 0.0
        %306 = vmatpush1.msra.mxu0 %v244
        %307 = vmatprep.subr.mxu0 0.0
        %308 = vmatpush1.msra.mxu0 0.0
        %309 = vmatprep.subr.mxu0 0.0
        %310 = vmatpush1.msra.mxu0 0.0
        %311 = vmatprep.subr.mxu0 0.0
        %312 = vmatpush1.msra.mxu0 0.0
        %313 = vmatprep.subr.mxu0 0.0
        %314 = vmatpush1.msra.mxu0 0.0
        %315 = vmatprep.subr.mxu0 0.0
        %316 = vmatpush1.msra.mxu0 0.0
        %317 = vmatprep.subr.mxu0 0.0
        %318 = vmatpush1.msra.mxu0 0.0
        %319 = vmatprep.subr.mxu0 0.0
        %320 = vmatpush1.msra.mxu0 0.0
        %321 = vmatprep.subr.mxu0 0.0
        %322 = vmatpush1.msra.mxu0 0.0
        %323 = vmatprep.subr.mxu0 0.0
        %324 = vmatpush1.msra.mxu0 0.0
        %325 = vmatprep.subr.mxu0 0.0
        %326 = vmatpush1.msra.mxu0 0.0
        %327 = vmatprep.subr.mxu0 0.0
        %328 = vmatpush1.msra.mxu0 0.0
        %329 = vmatprep.subr.mxu0 0.0
        %330 = vmatpush1.msra.mxu0 0.0
        %331 = vmatprep.subr.mxu0 0.0
        %332 = vmatpush1.msra.mxu0 0.0
        %333 = vmatprep.subr.mxu0 0.0
        %334 = vmatpush1.msra.mxu0 0.0
        %335 = vmatprep.subr.mxu0 0.0
        %336 = vmatpush1.msra.mxu0 0.0
        %337 = vmatprep.subr.mxu0 0.0
        %338 = vmatpush1.msra.mxu0 0.0
        %339 = vmatprep.subr.mxu0 0.0
        %340 = vmatpush1.msra.mxu0 0.0
        %341 = vmatprep.subr.mxu0 0.0
        %342 = vmatpush1.msra.mxu0 0.0
        %343 = vmatprep.subr.mxu0 0.0
        %344 = vmatpush1.msra.mxu0 0.0
        %345 = vmatprep.subr.mxu0 0.0
        %346 = vmatpush1.msra.mxu0 0.0
        %347 = vmatprep.subr.mxu0 0.0
        %348 = vmatpush1.msra.mxu0 0.0
        %349 = vmatprep.subr.mxu0 0.0
        %350 = vmatpush1.msra.mxu0 0.0
        %351 = vmatprep.subr.mxu0 0.0
        %352 = vmatpush1.msra.mxu0 0.0
        %353 = vmatprep.subr.mxu0 0.0
        %354 = vmatpush1.msra.mxu0 0.0
        %355 = vmatprep.subr.mxu0 0.0
        %356 = vmatpush1.msra.mxu0 0.0
        %357 = vmatprep.subr.mxu0 0.0
        %358 = vmatpush1.msra.mxu0 0.0
        %359 = vmatprep.subr.mxu0 0.0
        %360 = vmatpush1.msra.mxu0 0.0
        %361 = vmatprep.subr.mxu0 0.0
        %362 = vmatpush1.msra.mxu0 0.0
        %363 = vmatprep.subr.mxu0 0.0
        %364 = vmatpush1.msra.mxu0 0.0
        %365 = vmatprep.mubr.f32.mxu0 0.0
        %366 = vmatmul.mubr.f32.gmra.mrb[0].mxu0 %v254
        %v367 = vpop.f32.mrb[0].mxu0
        %v368 = vadd.f32 %v250, %v367
        %v369 = vpop.f32.mrb[0].mxu0
        %370 = vmatprep.mubr.f32.mxu0 0.0
        %371 = vmatmul.mubr.f32.gmra.mrb[0].mxu0 %v257
        %v372 = vpop.f32.mrb[0].mxu0
        %v373 = vadd.f32 %v250, %v372
        %v374 = vpop.f32.mrb[0].mxu0
        %375 = vmatprep.mubr.f32.mxu0 0.0
        %376 = vmatmul.mubr.f32.gmra.mrb[0].mxu0 %v260
        %v377 = vpop.f32.mrb[0].mxu0
        %v378 = vadd.f32 %v250, %v377
        %v379 = vpop.f32.mrb[0].mxu0
        %380 = vmatprep.mubr.f32.mxu0 0.0
        %381 = vmatmul.mubr.f32.gmra.mrb[0].mxu0 %v263
        %v382 = vpop.f32.mrb[0].mxu0
        %v383 = vadd.f32 %v250, %v382
        %v384 = vpop.f32.mrb[0].mxu0
        %385 = vmatprep.mubr.f32.mxu0 0.0
        %386 = vmatmul.mubr.f32.gmra.mrb[0].mxu0 %v266
        %v387 = vpop.f32.mrb[0].mxu0
        %v388 = vadd.f32 %v250, %v387
        %v389 = vpop.f32.mrb[0].mxu0
        %390 = vmatprep.mubr.f32.mxu0 0.0
        %391 = vmatmul.mubr.f32.gmra.mrb[0].mxu0 %v269
        %v392 = vpop.f32.mrb[0].mxu0
        %v393 = vadd.f32 %v250, %v392
        %v394 = vpop.f32.mrb[0].mxu0
        %395 = vmatprep.mubr.f32.mxu0 0.0
        %396 = vmatmul.mubr.f32.gmra.mrb[0].mxu0 %v272
        %v397 = vpop.f32.mrb[0].mxu0
        %v398 = vadd.f32 %v250, %v397
        %v399 = vpop.f32.mrb[0].mxu0
        %400 = vmatprep.mubr.f32.mxu0 0.0
        %401 = vmatmul.mubr.f32.gmra.mrb[0].mxu0 %v275
        %v402 = vpop.f32.mrb[0].mxu0
        %v403 = vadd.f32 %v250, %v402
        %v404 = vpop.f32.mrb[0].mxu0
        %405 = vmatprep.mubr.f32.mxu0 0.0
        %406 = vmatmul.mubr.f32.gmra.mrb[0].mxu0 %v278
        %v407 = vpop.f32.mrb[0].mxu0
        %v408 = vadd.f32 %v250, %v407
        %v409 = vpop.f32.mrb[0].mxu0
        %410 = vmatprep.mubr.f32.mxu0 0.0
        %411 = vmatmul.mubr.f32.gmra.mrb[0].mxu0 %v281
        %v412 = vpop.f32.mrb[0].mxu0
        %v413 = vadd.f32 %v250, %v412
        %v414 = vpop.f32.mrb[0].mxu0
        %415 = vmatprep.mubr.f32.mxu0 0.0
        %416 = vmatmul.mubr.f32.gmra.mrb[0].mxu0 %v284
        %v417 = vpop.f32.mrb[0].mxu0
        %v418 = vadd.f32 %v250, %v417
        %v419 = vpop.f32.mrb[0].mxu0
        %420 = vmatprep.mubr.f32.mxu0 0.0
        %421 = vmatmul.mubr.f32.gmra.mrb[0].mxu0 %v287
        %v422 = vpop.f32.mrb[0].mxu0
        %v423 = vadd.f32 %v250, %v422
        %v424 = vpop.f32.mrb[0].mxu0
        %425 = vmatprep.mubr.f32.mxu0 0.0
        %426 = vmatmul.mubr.f32.gmra.mrb[0].mxu0 %v290
        %v427 = vpop.f32.mrb[0].mxu0
        %v428 = vadd.f32 %v250, %v427
        %v429 = vpop.f32.mrb[0].mxu0
        %430 = vmatprep.mubr.f32.mxu0 0.0
        %431 = vmatmul.mubr.f32.gmra.mrb[0].mxu0 %v293
        %v432 = vpop.f32.mrb[0].mxu0
        %v433 = vadd.f32 %v250, %v432
        %v434 = vpop.f32.mrb[0].mxu0
        %435 = vmatprep.mubr.f32.mxu0 0.0
        %436 = vmatmul.mubr.f32.gmra.mrb[0].mxu0 %v296
        %v437 = vpop.f32.mrb[0].mxu0
        %v438 = vadd.f32 %v250, %v437
        %v439 = vpop.f32.mrb[0].mxu0
        %440 = vmatprep.mubr.f32.mxu0 0.0
        %441 = vmatmul.mubr.f32.gmra.mrb[0].mxu0 %v299
        %v442 = vpop.f32.mrb[0].mxu0
        %v443 = vadd.f32 %v250, %v442
        %v444 = vpop.f32.mrb[0].mxu0
        %445 = vdwg.mxu0
        %v446 = vtanh.pop %v368
        %v447 = vtanh.pop %v373
        %v448 = vtanh.pop %v378
        %v449 = vtanh.pop %v383
        %v450 = vtanh.pop %v388
        %v451 = vtanh.pop %v393
        %v452 = vtanh.pop %v398
        %v453 = vtanh.pop %v403
        %v454 = vtanh.pop %v408
        %v455 = vtanh.pop %v413
        %v456 = vtanh.pop %v418
        %v457 = vtanh.pop %v423
        %v458 = vtanh.pop %v428
        %v459 = vtanh.pop %v433
        %v460 = vtanh.pop %v438
        %v461 = vtanh.pop %v443
        %v462 = vld [vmem:[%s3] sm:$0x1]
        %v463 = vld [vmem:[#allocation2] sm:$0x1]
        %465 = vset.pattern.permute.xlu0 0
        %466 = vperm.xlu0 %465, %v463
        %v467 = vpop.permute.xlu0 %466
        %v469 = vlaneseq
        %v470 = vshrl.u32 %v469, 7
        %v471 = vsub.s32 0, %v470
        %v472 = vrot.slane %v467, %v471
        %vm473 = vcmask 39936
        %v475 = vsel %vm473, %v462, 0
        %v478 = vsel %vm473, %v446, 0
        %v481 = vsel %vm473, %v447, 0
        %v484 = vsel %vm473, %v448, 0
        %v487 = vsel %vm473, %v449, 0
        %v490 = vsel %vm473, %v450, 0
        %v493 = vsel %vm473, %v451, 0
        %v496 = vsel %vm473, %v452, 0
        %v499 = vsel %vm473, %v453, 0
        %v502 = vsel %vm473, %v454, 0
        %v505 = vsel %vm473, %v455, 0
        %v508 = vsel %vm473, %v456, 0
        %v511 = vsel %vm473, %v457, 0
        %v514 = vsel %vm473, %v458, 0
        %v517 = vsel %vm473, %v459, 0
        %v520 = vsel %vm473, %v460, 0
        %v523 = vsel %vm473, %v461, 0
        %525 = vmatprep.subr.mxu0 0.0
        %526 = vmatpush1.xpose.msra.mxu0 %v478
        %527 = vmatprep.subr.mxu0 0.0
        %528 = vmatpush1.xpose.msra.mxu0 %v481
        %529 = vmatprep.subr.mxu0 0.0
        %530 = vmatpush1.xpose.msra.mxu0 %v484
        %531 = vmatprep.subr.mxu0 0.0
        %532 = vmatpush1.xpose.msra.mxu0 %v487
        %533 = vmatprep.subr.mxu0 0.0
        %534 = vmatpush1.xpose.msra.mxu0 %v490
        %535 = vmatprep.subr.mxu0 0.0
        %536 = vmatpush1.xpose.msra.mxu0 %v493
        %537 = vmatprep.subr.mxu0 0.0
        %538 = vmatpush1.xpose.msra.mxu0 %v496
        %539 = vmatprep.subr.mxu0 0.0
        %540 = vmatpush1.xpose.msra.mxu0 %v499
        %541 = vmatprep.subr.mxu0 0.0
        %542 = vmatpush1.xpose.msra.mxu0 %v502
        %543 = vmatprep.subr.mxu0 0.0
        %544 = vmatpush1.xpose.msra.mxu0 %v505
        %545 = vmatprep.subr.mxu0 0.0
        %546 = vmatpush1.xpose.msra.mxu0 %v508
        %547 = vmatprep.subr.mxu0 0.0
        %548 = vmatpush1.xpose.msra.mxu0 %v511
        %549 = vmatprep.subr.mxu0 0.0
        %550 = vmatpush1.xpose.msra.mxu0 %v514
        %551 = vmatprep.subr.mxu0 0.0
        %552 = vmatpush1.xpose.msra.mxu0 %v517
        %553 = vmatprep.subr.mxu0 0.0
        %554 = vmatpush1.xpose.msra.mxu0 %v520
        %555 = vmatprep.subr.mxu0 0.0
        %556 = vmatpush1.xpose.msra.mxu0 %v523
        %557 = vmatprep.subr.mxu0 0.0
        %558 = vmatpush1.xpose.msra.mxu0 0.0
        %559 = vmatprep.subr.mxu0 0.0
        %560 = vmatpush1.xpose.msra.mxu0 0.0
        %561 = vmatprep.subr.mxu0 0.0
        %562 = vmatpush1.xpose.msra.mxu0 0.0
        %563 = vmatprep.subr.mxu0 0.0
        %564 = vmatpush1.xpose.msra.mxu0 0.0
        %565 = vmatprep.subr.mxu0 0.0
        %566 = vmatpush1.xpose.msra.mxu0 0.0
        %567 = vmatprep.subr.mxu0 0.0
        %568 = vmatpush1.xpose.msra.mxu0 0.0
        %569 = vmatprep.subr.mxu0 0.0
        %570 = vmatpush1.xpose.msra.mxu0 0.0
        %571 = vmatprep.subr.mxu0 0.0
        %572 = vmatpush1.xpose.msra.mxu0 0.0
        %573 = vmatprep.subr.mxu0 0.0
        %574 = vmatpush1.xpose.msra.mxu0 0.0
        %575 = vmatprep.subr.mxu0 0.0
        %576 = vmatpush1.xpose.msra.mxu0 0.0
        %577 = vmatprep.subr.mxu0 0.0
        %578 = vmatpush1.xpose.msra.mxu0 0.0
        %579 = vmatprep.subr.mxu0 0.0
        %580 = vmatpush1.xpose.msra.mxu0 0.0
        %581 = vmatprep.subr.mxu0 0.0
        %582 = vmatpush1.xpose.msra.mxu0 0.0
        %583 = vmatprep.subr.mxu0 0.0
        %584 = vmatpush1.xpose.msra.mxu0 0.0
        %585 = vmatprep.subr.mxu0 0.0
        %586 = vmatpush1.xpose.msra.mxu0 0.0
        %587 = vmatprep.subr.mxu0 0.0
        %588 = vmatpush1.xpose.msra.mxu0 0.0
        %589 = vmatprep.mubr.f32.mxu0 0.0
        %590 = vmatmul.mubr.f32.gmra.mrb[0].mxu0 %v475
        %v591 = vpop.f32.mrb[0].mxu0
        %v592 = vadd.f32 %v472, %v591
        %v593 = vpop.f32.mrb[0].mxu0
        %594 = vdwg.mxu0
        %v595 = vmax.f32 %v592, 0.0
        %596 = vst [vmem:[%s219] sm:$0x1] %v595
        %s597 = sand.u32 %s139, 1
        %s598 = scalar_lea.sflag [#allocation4], %s597
        %s599 = sand.u32 %s139, 1
        %s600 = scalar_lea.vmem [#allocation3], %s599
        // Predicated region
        $region41: #{tpu_custom_call.1} parent=39 // pred_check
          %p601 = pneg %p149
        $region42: #{tpu_custom_call.1} parent=39 // pred_check_branch
          %603 = sbr.rel (%p601) target = $region44
        $region43: #{tpu_custom_call.1} parent=39 // pred_region
          %s605 = ssub.s32 16, 16
          %606 = vsyncadd %s598, %s605
          %s607 = smul.addr %s21, 16
          %s608 = scalar_lea.hbm %s5, %s607
          %s610 = sshll.u32 %s600, 4
          %s611 = int_to_ptr.vmem [resolvable:$true] %s610
          %613 = dma.vmem_to_hbm [thread:$0]  %s611, 16, %s608, %s598
        $region44: #{tpu_custom_call.1} parent=39 // pred_fallthru
          _
      $region40: #{tpu_custom_call.1} parent=5 // pred_fallthru
        _
      %p614 = scmp.le.s32.totalorder 2, %s16
      // Predicated region
      $region45: #{tpu_custom_call.1} parent=5 // pred_check
        %p615 = pneg %p614
      $region46: #{tpu_custom_call.1} parent=5 // pred_check_branch
        %617 = sbr.rel (%p615) target = $region48
      $region47: #{tpu_custom_call.1} parent=5 // pred_region
        %s618 = ssub.s32 %s16, 2
        // Predicated region
        $region49: #{tpu_custom_call.1} parent=47 // pred_check
          %p619 = pneg %p155
        $region50: #{tpu_custom_call.1} parent=47 // pred_check_branch
          %621 = sbr.rel (%p619) target = $region52
        $region51: #{tpu_custom_call.1} parent=47 // pred_region
          %s622 = sand.u32 %s140, 1
          %s623 = scalar_lea.sflag [#allocation4], %s622
          %s624 = sand.u32 %s140, 1
          %s625 = scalar_lea.vmem [#allocation3], %s624
          %626 = dma.done %s623, 16
        $region52: #{tpu_custom_call.1} parent=47 // pred_fallthru
          _
      $region48: #{tpu_custom_call.1} parent=5 // pred_fallthru
        _
    $region6: #{tpu_custom_call.1} parent=1 // loop_footer
      %s20 = sadd.s32 1, %s16
    $region7: #{tpu_custom_call.1} parent=1 // loop_footer_branch
      %15 = sbr.rel target = $region3
    $region8: #{tpu_custom_call.1} parent=1 // loop_exit
      _
    %627 = vsyncpa [#allocation4], 1
    %s628 = scalar_lea.sflag [#allocation4], 1
    %629 = vsyncpa %s628, 1

// kernel: tpu_custom_call.1
$region0: #{tpu_custom_call.1}
  #allocation0 [shape = 'u32[]', space=smem, size = 0x4, offset = 0x4, fixed_abs, tag = 'smem constant byte address 0x4 - core index']
  #allocation1 [shape = 'u32[144,128]{1,0:T(1,128)}', space=vmem, size = 0x12000, scoped, tag = 'internal scratch']
  #allocation2 [shape = 'f32[1,1]{1,0:T(1,128)S(1)}', space=vmem, size = 0x200, scoped, tag = 'scoped memory for tpu_custom_call.1']
  %s0 = inlined_call_operand.vmem [shape: f32[256,24], index: 0, kind: input, shape index: {}]
  %s1 = inlined_call_operand.vmem [shape: f32[24,5], index: 1, kind: input, shape index: {}]
  %s2 = inlined_call_operand.vmem [shape: f32[1,5], index: 2, kind: input, shape index: {}]
  %s3 = inlined_call_operand.vmem [shape: f32[1,5], index: 3, kind: input, shape index: {}]
  %s4 = inlined_call_operand.<no memory space> [shape: f32[1,1], index: 4, kind: input, shape index: {}]
  %s5 = inlined_call_operand.vmem [shape: f32[256,1], index: 5, kind: output, shape index: {}]
  %s6 = sld [smem:[#allocation0]]
  $region53: #{tpu_custom_call.1} parent=0
    _
  %s8 = ssub.s32 1, %s6
  %s9 = scalar_select 0, %s8, %s6
  %v10 = vstv %s4
  %11 = vst [vmem:[#allocation2] sm:$0x1] %v10
  loop: start=0, step=1, limit=4
  $region2: #{tpu_custom_call.1} parent=0 // loop_pre_header
    _
  $region3: #{tpu_custom_call.1} parent=0 // loop_header
    %s13 = sphi 0, %s17
    %p14 = scmp.ge.s32.totalorder %s13, 4
    %s23 = sphi 0, %s25
    %s26 = sphi 0, %s23
    %s27 = sphi 0, %s26
    %s43 = sphi 0, %s27
    %s47 = sphi 0, %s47
    %s49 = sphi 0, %s47
    %s50 = sphi 0, %s49
    %s64 = sphi 0, %s50
    %s68 = sphi 0, %s68
    %s70 = sphi 0, %s68
    %s71 = sphi 0, %s70
    %s85 = sphi 0, %s71
    %s89 = sphi 0, %s89
    %s91 = sphi 0, %s89
    %s92 = sphi 0, %s91
    %s106 = sphi 0, %s92
    %s110 = sphi 0, %s110
    %s112 = sphi 0, %s110
    %s113 = sphi 0, %s112
    %s127 = sphi 0, %s113
    %s133 = sphi 0, %s135
    %s136 = sphi 0, %s133
    %s137 = sphi 0, %s136
    %s153 = sphi 0, %s137
  $region4: #{tpu_custom_call.1} parent=0 // loop_header_branch
    %16 = sbr.rel (%p14) target = $region8
  $region5: #{tpu_custom_call.1} parent=0 // loop_body
    %s18 = ssub.s32 %s13, 1
    %s19 = ssub.s32 %s13, 2
    %s20 = sadd.s32 %s13, 1
    %s21 = ssub.s32 %s13, %s20
    %p22 = scmp.eq.s32.totalorder %s21, 0
    %s24 = sadd.s32 %s23, 1
    %s25 = scalar_select %p22, %s23, %s24
    %p28 = pneg %p22
    %p29 = scmp.eq.s32.totalorder %s13, 1
    %p30 = por %p28, %p29
    %p31 = scmp.ne.s32.totalorder %s23, %s26
    %p32 = scmp.eq.s32.totalorder %s13, 0
    %p33 = por %p31, %p32
    %p34 = scmp.ne.s32.totalorder %s23, %s26
    %p35 = scmp.eq.s32.totalorder %s18, 1
    %p36 = por %p34, %p35
    %p37 = scmp.ne.s32.totalorder %s26, %s27
    %p38 = scmp.eq.s32.totalorder %s18, 0
    %p39 = por %p37, %p38
    %p40 = scmp.ne.s32.totalorder %s26, %s27
    %p41 = scmp.eq.s32.totalorder %s19, 1
    %p42 = por %p40, %p41
    %p44 = scmp.ne.s32.totalorder %s27, %s43
    %p45 = scmp.eq.s32.totalorder %s19, 0
    %p46 = por %p44, %p45
    %s48 = sadd.s32 %s47, 1
    %p51 = scmp.eq.s32.totalorder %s13, 1
    %p52 = scmp.ne.s32.totalorder %s47, %s49
    %p53 = scmp.eq.s32.totalorder %s13, 0
    %p54 = por %p52, %p53
    %p55 = scmp.ne.s32.totalorder %s47, %s49
    %p56 = scmp.eq.s32.totalorder %s18, 1
    %p57 = por %p55, %p56
    %p58 = scmp.ne.s32.totalorder %s49, %s50
    %p59 = scmp.eq.s32.totalorder %s18, 0
    %p60 = por %p58, %p59
    %p61 = scmp.ne.s32.totalorder %s49, %s50
    %p62 = scmp.eq.s32.totalorder %s19, 1
    %p63 = por %p61, %p62
    %p65 = scmp.ne.s32.totalorder %s50, %s64
    %p66 = scmp.eq.s32.totalorder %s19, 0
    %p67 = por %p65, %p66
    %s69 = sadd.s32 %s68, 1
    %p72 = scmp.eq.s32.totalorder %s13, 1
    %p73 = scmp.ne.s32.totalorder %s68, %s70
    %p74 = scmp.eq.s32.totalorder %s13, 0
    %p75 = por %p73, %p74
    %p76 = scmp.ne.s32.totalorder %s68, %s70
    %p77 = scmp.eq.s32.totalorder %s18, 1
    %p78 = por %p76, %p77
    %p79 = scmp.ne.s32.totalorder %s70, %s71
    %p80 = scmp.eq.s32.totalorder %s18, 0
    %p81 = por %p79, %p80
    %p82 = scmp.ne.s32.totalorder %s70, %s71
    %p83 = scmp.eq.s32.totalorder %s19, 1
    %p84 = por %p82, %p83
    %p86 = scmp.ne.s32.totalorder %s71, %s85
    %p87 = scmp.eq.s32.totalorder %s19, 0
    %p88 = por %p86, %p87
    %s90 = sadd.s32 %s89, 1
    %p93 = scmp.eq.s32.totalorder %s13, 1
    %p94 = scmp.ne.s32.totalorder %s89, %s91
    %p95 = scmp.eq.s32.totalorder %s13, 0
    %p96 = por %p94, %p95
    %p97 = scmp.ne.s32.totalorder %s89, %s91
    %p98 = scmp.eq.s32.totalorder %s18, 1
    %p99 = por %p97, %p98
    %p100 = scmp.ne.s32.totalorder %s91, %s92
    %p101 = scmp.eq.s32.totalorder %s18, 0
    %p102 = por %p100, %p101
    %p103 = scmp.ne.s32.totalorder %s91, %s92
    %p104 = scmp.eq.s32.totalorder %s19, 1
    %p105 = por %p103, %p104
    %p107 = scmp.ne.s32.totalorder %s92, %s106
    %p108 = scmp.eq.s32.totalorder %s19, 0
    %p109 = por %p107, %p108
    %s111 = sadd.s32 %s110, 1
    %p114 = scmp.eq.s32.totalorder %s13, 1
    %p115 = scmp.ne.s32.totalorder %s110, %s112
    %p116 = scmp.eq.s32.totalorder %s13, 0
    %p117 = por %p115, %p116
    %p118 = scmp.ne.s32.totalorder %s110, %s112
    %p119 = scmp.eq.s32.totalorder %s18, 1
    %p120 = por %p118, %p119
    %p121 = scmp.ne.s32.totalorder %s112, %s113
    %p122 = scmp.eq.s32.totalorder %s18, 0
    %p123 = por %p121, %p122
    %p124 = scmp.ne.s32.totalorder %s112, %s113
    %p125 = scmp.eq.s32.totalorder %s19, 1
    %p126 = por %p124, %p125
    %p128 = scmp.ne.s32.totalorder %s113, %s127
    %p129 = scmp.eq.s32.totalorder %s19, 0
    %p130 = por %p128, %p129
    %s131 = ssub.s32 %s13, %s20
    %p132 = scmp.eq.s32.totalorder %s131, 0
    %s134 = sadd.s32 %s133, 1
    %s135 = scalar_select %p132, %s133, %s134
    %p138 = pneg %p132
    %p139 = scmp.eq.s32.totalorder %s13, 1
    %p140 = por %p138, %p139
    %p141 = scmp.ne.s32.totalorder %s133, %s136
    %p142 = scmp.eq.s32.totalorder %s13, 0
    %p143 = por %p141, %p142
    %p144 = scmp.ne.s32.totalorder %s133, %s136
    %p145 = scmp.eq.s32.totalorder %s18, 1
    %p146 = por %p144, %p145
    %p147 = scmp.ne.s32.totalorder %s136, %s137
    %p148 = scmp.eq.s32.totalorder %s18, 0
    %p149 = por %p147, %p148
    %p150 = scmp.ne.s32.totalorder %s136, %s137
    %p151 = scmp.eq.s32.totalorder %s19, 1
    %p152 = por %p150, %p151
    %p154 = scmp.ne.s32.totalorder %s137, %s153
    %p155 = scmp.eq.s32.totalorder %s19, 0
    %p156 = por %p154, %p155
    %p157 = scmp.le.s32.totalorder 1, %s13
    %p158 = scmp.lt.s32.totalorder %s13, 3
    %p159 = pnand %p157, %p158
    %p160 = pneg %p159
    // Predicated region
    $region9: #{tpu_custom_call.1} parent=5 // pred_check
      _
    $region10: #{tpu_custom_call.1} parent=5 // pred_check_branch
      %162 = sbr.rel (%p159) target = $region12
    $region11: #{tpu_custom_call.1} parent=5 // pred_region
      %s163 = ssub.s32 %s13, 1
      // Predicated region
      $region13: #{tpu_custom_call.1} parent=11 // pred_check
        %p164 = pneg %p60
      $region14: #{tpu_custom_call.1} parent=11 // pred_check_branch
        %166 = sbr.rel (%p164) target = $region16
      $region15: #{tpu_custom_call.1} parent=11 // pred_region
        _
      $region16: #{tpu_custom_call.1} parent=11 // pred_fallthru
        _
      // Predicated region
      $region17: #{tpu_custom_call.1} parent=11 // pred_check
        %p167 = pneg %p81
      $region18: #{tpu_custom_call.1} parent=11 // pred_check_branch
        %169 = sbr.rel (%p167) target = $region20
      $region19: #{tpu_custom_call.1} parent=11 // pred_region
        _
      $region20: #{tpu_custom_call.1} parent=11 // pred_fallthru
        _
      // Predicated region
      $region21: #{tpu_custom_call.1} parent=11 // pred_check
        %p170 = pneg %p102
      $region22: #{tpu_custom_call.1} parent=11 // pred_check_branch
        %172 = sbr.rel (%p170) target = $region24
      $region23: #{tpu_custom_call.1} parent=11 // pred_region
        _
      $region24: #{tpu_custom_call.1} parent=11 // pred_fallthru
        _
      // Predicated region
      $region25: #{tpu_custom_call.1} parent=11 // pred_check
        %p173 = pneg %p123
      $region26: #{tpu_custom_call.1} parent=11 // pred_check_branch
        %175 = sbr.rel (%p173) target = $region28
      $region27: #{tpu_custom_call.1} parent=11 // pred_region
        _
      $region28: #{tpu_custom_call.1} parent=11 // pred_fallthru
        _
    $region12: #{tpu_custom_call.1} parent=5 // pred_fallthru
      _
    %p176 = scmp.lt.s32.totalorder %s13, 2
    // Predicated region
    $region29: #{tpu_custom_call.1} parent=5 // pred_check
      %p177 = pneg %p176
    $region30: #{tpu_custom_call.1} parent=5 // pred_check_branch
      %179 = sbr.rel (%p177) target = $region32
    $region31: #{tpu_custom_call.1} parent=5 // pred_region
      // Predicated region
      $region33: #{tpu_custom_call.1} parent=31 // pred_check
        %p180 = pneg %p33
      $region34: #{tpu_custom_call.1} parent=31 // pred_check_branch
        %182 = sbr.rel (%p180) target = $region36
      $region35: #{tpu_custom_call.1} parent=31 // pred_region
        %s183 = smul.u32 16, %s13
        %p184 = scmp.lt.s32.totalorder %s183, 31
        %s185 = scalar_select %p184, %s183, 31
        %s186 = smul.addr %s185, 8
        %s187 = scalar_lea.vmem %s0, %s186
        %s188 = smul.u32 16, %s13
      $region36: #{tpu_custom_call.1} parent=31 // pred_fallthru
        _
    $region32: #{tpu_custom_call.1} parent=5 // pred_fallthru
      _
    %p189 = scmp.le.s32.totalorder 1, %s13
    %p190 = scmp.lt.s32.totalorder %s13, 3
    %p191 = pnand %p189, %p190
    %p192 = pneg %p191
    // Predicated region
    $region37: #{tpu_custom_call.1} parent=5 // pred_check
      _
    $region38: #{tpu_custom_call.1} parent=5 // pred_check_branch
      %194 = sbr.rel (%p191) target = $region40
    $region39: #{tpu_custom_call.1} parent=5 // pred_region
      %s195 = ssub.s32 %s13, 1
      %s196 = smul.u32 16, %s18
      %p197 = scmp.lt.s32.totalorder %s196, 31
      %s198 = scalar_select %p197, %s196, 31
      %s199 = smul.addr %s198, 8
      %s200 = scalar_lea.vmem %s0, %s199
      %p201 = pneg %p39
      %p202 = pneg %p36
      %p203 = pneg %p60
      %p204 = pneg %p57
      %p205 = pneg %p81
      %p206 = pneg %p78
      %p207 = pneg %p102
      %p208 = pneg %p99
      %p209 = pneg %p123
      %p210 = pneg %p120
      %p211 = pneg %p149
      %p212 = pneg %p146
      %s213 = smul.u32 16, %s18
      %p214 = scmp.lt.s32.totalorder %s213, 31
      %s215 = scalar_select %p214, %s213, 31
      %s216 = smul.addr %s215, 8
      %s217 = scalar_lea.vmem %s5, %s216
      %s218 = smul.u32 16, %s18
      %p219 = scmp.lt.s32.totalorder %s218, 31
      %s220 = scalar_select %p219, %s218, 31
      %s221 = smul.addr %s220, 8
      %s222 = scalar_lea.vmem %s0, %s221
      %s223 = smul.u32 16, %s18
      %s224 = smul.u32 16, %s18
      %p225 = scmp.lt.s32.totalorder %s224, 31
      %s226 = scalar_select %p225, %s224, 31
      %s227 = smul.addr %s226, 8
      %s228 = scalar_lea.vmem %s5, %s227
      %s229 = smul.u32 16, %s18
      %v230 = vld [vmem:[%s222] sm:$0xff]
      %v231 = vld [vmem:[%s222 + $0x8] sm:$0xff]
      %v232 = vld [vmem:[%s222 + $0x10] sm:$0xff]
      %v233 = vld [vmem:[%s222 + $0x18] sm:$0xff]
      %v234 = vld [vmem:[%s222 + $0x20] sm:$0xff]
      %v235 = vld [vmem:[%s222 + $0x28] sm:$0xff]
      %v236 = vld [vmem:[%s222 + $0x30] sm:$0xff]
      %v237 = vld [vmem:[%s222 + $0x38] sm:$0xff]
      %v238 = vld [vmem:[%s222 + $0x40] sm:$0xff]
      %v239 = vld [vmem:[%s222 + $0x48] sm:$0xff]
      %v240 = vld [vmem:[%s222 + $0x50] sm:$0xff]
      %v241 = vld [vmem:[%s222 + $0x58] sm:$0xff]
      %v242 = vld [vmem:[%s222 + $0x60] sm:$0xff]
      %v243 = vld [vmem:[%s222 + $0x68] sm:$0xff]
      %v244 = vld [vmem:[%s222 + $0x70] sm:$0xff]
      %v245 = vld [vmem:[%s222 + $0x78] sm:$0xff]
      %v246 = vld [vmem:[%s1] sm:$0xff]
      %v247 = vld [vmem:[%s1 + $0x8] sm:$0xff]
      %v248 = vld [vmem:[%s1 + $0x10] sm:$0xff]
      %v249 = vld [vmem:[%s2] sm:$0x1]
      %v251 = vlaneseq
      %v252 = vshrl.u32 %v251, 7
      %v253 = vsub.s32 0, %v252
      %v254 = vrot.slane %v249, %v253
      %vm256 = vcmask 195584
      %v258 = vsel %vm256, %v230, 0
      %v261 = vsel %vm256, %v231, 0
      %v264 = vsel %vm256, %v232, 0
      %v267 = vsel %vm256, %v233, 0
      %v270 = vsel %vm256, %v234, 0
      %v273 = vsel %vm256, %v235, 0
      %v276 = vsel %vm256, %v236, 0
      %v279 = vsel %vm256, %v237, 0
      %v282 = vsel %vm256, %v238, 0
      %v285 = vsel %vm256, %v239, 0
      %v288 = vsel %vm256, %v240, 0
      %v291 = vsel %vm256, %v241, 0
      %v294 = vsel %vm256, %v242, 0
      %v297 = vsel %vm256, %v243, 0
      %v300 = vsel %vm256, %v244, 0
      %v303 = vsel %vm256, %v245, 0
      %305 = vmatprep.subr.mxu0 0.0
      %306 = vmatpush1.msra.mxu0 %v246
      %307 = vmatprep.subr.mxu0 0.0
      %308 = vmatpush1.msra.mxu0 %v247
      %309 = vmatprep.subr.mxu0 0.0
      %310 = vmatpush1.msra.mxu0 %v248
      %311 = vmatprep.subr.mxu0 0.0
      %312 = vmatpush1.msra.mxu0 0.0
      %313 = vmatprep.subr.mxu0 0.0
      %314 = vmatpush1.msra.mxu0 0.0
      %315 = vmatprep.subr.mxu0 0.0
      %316 = vmatpush1.msra.mxu0 0.0
      %317 = vmatprep.subr.mxu0 0.0
      %318 = vmatpush1.msra.mxu0 0.0
      %319 = vmatprep.subr.mxu0 0.0
      %320 = vmatpush1.msra.mxu0 0.0
      %321 = vmatprep.subr.mxu0 0.0
      %322 = vmatpush1.msra.mxu0 0.0
      %323 = vmatprep.subr.mxu0 0.0
      %324 = vmatpush1.msra.mxu0 0.0
      %325 = vmatprep.subr.mxu0 0.0
      %326 = vmatpush1.msra.mxu0 0.0
      %327 = vmatprep.subr.mxu0 0.0
      %328 = vmatpush1.msra.mxu0 0.0
      %329 = vmatprep.subr.mxu0 0.0
      %330 = vmatpush1.msra.mxu0 0.0
      %331 = vmatprep.subr.mxu0 0.0
      %332 = vmatpush1.msra.mxu0 0.0
      %333 = vmatprep.subr.mxu0 0.0
      %334 = vmatpush1.msra.mxu0 0.0
      %335 = vmatprep.subr.mxu0 0.0
      %336 = vmatpush1.msra.mxu0 0.0
      %337 = vmatprep.subr.mxu0 0.0
      %338 = vmatpush1.msra.mxu0 0.0
      %339 = vmatprep.subr.mxu0 0.0
      %340 = vmatpush1.msra.mxu0 0.0
      %341 = vmatprep.subr.mxu0 0.0
      %342 = vmatpush1.msra.mxu0 0.0
      %343 = vmatprep.subr.mxu0 0.0
      %344 = vmatpush1.msra.mxu0 0.0
      %345 = vmatprep.subr.mxu0 0.0
      %346 = vmatpush1.msra.mxu0 0.0
      %347 = vmatprep.subr.mxu0 0.0
      %348 = vmatpush1.msra.mxu0 0.0
      %349 = vmatprep.subr.mxu0 0.0
      %350 = vmatpush1.msra.mxu0 0.0
      %351 = vmatprep.subr.mxu0 0.0
      %352 = vmatpush1.msra.mxu0 0.0
      %353 = vmatprep.subr.mxu0 0.0
      %354 = vmatpush1.msra.mxu0 0.0
      %355 = vmatprep.subr.mxu0 0.0
      %356 = vmatpush1.msra.mxu0 0.0
      %357 = vmatprep.subr.mxu0 0.0
      %358 = vmatpush1.msra.mxu0 0.0
      %359 = vmatprep.subr.mxu0 0.0
      %360 = vmatpush1.msra.mxu0 0.0
      %361 = vmatprep.subr.mxu0 0.0
      %362 = vmatpush1.msra.mxu0 0.0
      %363 = vmatprep.subr.mxu0 0.0
      %364 = vmatpush1.msra.mxu0 0.0
      %365 = vmatprep.subr.mxu0 0.0
      %366 = vmatpush1.msra.mxu0 0.0
      %367 = vmatprep.subr.mxu0 0.0
      %368 = vmatpush1.msra.mxu0 0.0
      %369 = vmatprep.mubr.f32.mxu0 0.0
      %370 = vmatmul.mubr.f32.gmra.mrb[0].mxu0 %v258
      %v371 = vpop.f32.mrb[0].mxu0
      %v372 = vadd.f32 %v254, %v371
      %v373 = vpop.f32.mrb[0].mxu0
      %374 = vmatprep.mubr.f32.mxu0 0.0
      %375 = vmatmul.mubr.f32.gmra.mrb[0].mxu0 %v261
      %v376 = vpop.f32.mrb[0].mxu0
      %v377 = vadd.f32 %v254, %v376
      %v378 = vpop.f32.mrb[0].mxu0
      %379 = vmatprep.mubr.f32.mxu0 0.0
      %380 = vmatmul.mubr.f32.gmra.mrb[0].mxu0 %v264
      %v381 = vpop.f32.mrb[0].mxu0
      %v382 = vadd.f32 %v254, %v381
      %v383 = vpop.f32.mrb[0].mxu0
      %384 = vmatprep.mubr.f32.mxu0 0.0
      %385 = vmatmul.mubr.f32.gmra.mrb[0].mxu0 %v267
      %v386 = vpop.f32.mrb[0].mxu0
      %v387 = vadd.f32 %v254, %v386
      %v388 = vpop.f32.mrb[0].mxu0
      %389 = vmatprep.mubr.f32.mxu0 0.0
      %390 = vmatmul.mubr.f32.gmra.mrb[0].mxu0 %v270
      %v391 = vpop.f32.mrb[0].mxu0
      %v392 = vadd.f32 %v254, %v391
      %v393 = vpop.f32.mrb[0].mxu0
      %394 = vmatprep.mubr.f32.mxu0 0.0
      %395 = vmatmul.mubr.f32.gmra.mrb[0].mxu0 %v273
      %v396 = vpop.f32.mrb[0].mxu0
      %v397 = vadd.f32 %v254, %v396
      %v398 = vpop.f32.mrb[0].mxu0
      %399 = vmatprep.mubr.f32.mxu0 0.0
      %400 = vmatmul.mubr.f32.gmra.mrb[0].mxu0 %v276
      %v401 = vpop.f32.mrb[0].mxu0
      %v402 = vadd.f32 %v254, %v401
      %v403 = vpop.f32.mrb[0].mxu0
      %404 = vmatprep.mubr.f32.mxu0 0.0
      %405 = vmatmul.mubr.f32.gmra.mrb[0].mxu0 %v279
      %v406 = vpop.f32.mrb[0].mxu0
      %v407 = vadd.f32 %v254, %v406
      %v408 = vpop.f32.mrb[0].mxu0
      %409 = vmatprep.mubr.f32.mxu0 0.0
      %410 = vmatmul.mubr.f32.gmra.mrb[0].mxu0 %v282
      %v411 = vpop.f32.mrb[0].mxu0
      %v412 = vadd.f32 %v254, %v411
      %v413 = vpop.f32.mrb[0].mxu0
      %414 = vmatprep.mubr.f32.mxu0 0.0
      %415 = vmatmul.mubr.f32.gmra.mrb[0].mxu0 %v285
      %v416 = vpop.f32.mrb[0].mxu0
      %v417 = vadd.f32 %v254, %v416
      %v418 = vpop.f32.mrb[0].mxu0
      %419 = vmatprep.mubr.f32.mxu0 0.0
      %420 = vmatmul.mubr.f32.gmra.mrb[0].mxu0 %v288
      %v421 = vpop.f32.mrb[0].mxu0
      %v422 = vadd.f32 %v254, %v421
      %v423 = vpop.f32.mrb[0].mxu0
      %424 = vmatprep.mubr.f32.mxu0 0.0
      %425 = vmatmul.mubr.f32.gmra.mrb[0].mxu0 %v291
      %v426 = vpop.f32.mrb[0].mxu0
      %v427 = vadd.f32 %v254, %v426
      %v428 = vpop.f32.mrb[0].mxu0
      %429 = vmatprep.mubr.f32.mxu0 0.0
      %430 = vmatmul.mubr.f32.gmra.mrb[0].mxu0 %v294
      %v431 = vpop.f32.mrb[0].mxu0
      %v432 = vadd.f32 %v254, %v431
      %v433 = vpop.f32.mrb[0].mxu0
      %434 = vmatprep.mubr.f32.mxu0 0.0
      %435 = vmatmul.mubr.f32.gmra.mrb[0].mxu0 %v297
      %v436 = vpop.f32.mrb[0].mxu0
      %v437 = vadd.f32 %v254, %v436
      %v438 = vpop.f32.mrb[0].mxu0
      %439 = vmatprep.mubr.f32.mxu0 0.0
      %440 = vmatmul.mubr.f32.gmra.mrb[0].mxu0 %v300
      %v441 = vpop.f32.mrb[0].mxu0
      %v442 = vadd.f32 %v254, %v441
      %v443 = vpop.f32.mrb[0].mxu0
      %444 = vmatprep.mubr.f32.mxu0 0.0
      %445 = vmatmul.mubr.f32.gmra.mrb[0].mxu0 %v303
      %v446 = vpop.f32.mrb[0].mxu0
      %v447 = vadd.f32 %v254, %v446
      %v448 = vpop.f32.mrb[0].mxu0
      %449 = vdwg.mxu0
      %v450 = vtanh.pop %v372
      %v451 = vtanh.pop %v377
      %v452 = vtanh.pop %v382
      %v453 = vtanh.pop %v387
      %v454 = vtanh.pop %v392
      %v455 = vtanh.pop %v397
      %v456 = vtanh.pop %v402
      %v457 = vtanh.pop %v407
      %v458 = vtanh.pop %v412
      %v459 = vtanh.pop %v417
      %v460 = vtanh.pop %v422
      %v461 = vtanh.pop %v427
      %v462 = vtanh.pop %v432
      %v463 = vtanh.pop %v437
      %v464 = vtanh.pop %v442
      %v465 = vtanh.pop %v447
      %v466 = vld [vmem:[%s3] sm:$0x1]
      %v468 = vlaneseq
      %v469 = vshrl.u32 %v468, 7
      %v470 = vsub.s32 0, %v469
      %v471 = vrot.slane %v466, %v470
      %v473 = vmul.f32 %v450, %v471
      %v474 = vmul.f32 %v451, %v471
      %v475 = vmul.f32 %v452, %v471
      %v476 = vmul.f32 %v453, %v471
      %v477 = vmul.f32 %v454, %v471
      %v478 = vmul.f32 %v455, %v471
      %v479 = vmul.f32 %v456, %v471
      %v480 = vmul.f32 %v457, %v471
      %v481 = vmul.f32 %v458, %v471
      %v482 = vmul.f32 %v459, %v471
      %v483 = vmul.f32 %v460, %v471
      %v484 = vmul.f32 %v461, %v471
      %v485 = vmul.f32 %v462, %v471
      %v486 = vmul.f32 %v463, %v471
      %v487 = vmul.f32 %v464, %v471
      %v488 = vmul.f32 %v465, %v471
      %vm489 = vcmask 39936
      %v490 = vsel %vm489, %v473, 0.0
      %491 = vadd.xlane.f32.xlu0 %v490
      %v492 = vpop.xlane.xlu0 %491
      %v493 = vsel %vm489, %v474, 0.0
      %494 = vadd.xlane.f32.xlu0 %v493
      %v495 = vpop.xlane.xlu0 %494
      %v496 = vsel %vm489, %v475, 0.0
      %497 = vadd.xlane.f32.xlu0 %v496
      %v498 = vpop.xlane.xlu0 %497
      %v499 = vsel %vm489, %v476, 0.0
      %500 = vadd.xlane.f32.xlu0 %v499
      %v501 = vpop.xlane.xlu0 %500
      %v502 = vsel %vm489, %v477, 0.0
      %503 = vadd.xlane.f32.xlu0 %v502
      %v504 = vpop.xlane.xlu0 %503
      %v505 = vsel %vm489, %v478, 0.0
      %506 = vadd.xlane.f32.xlu0 %v505
      %v507 = vpop.xlane.xlu0 %506
      %v508 = vsel %vm489, %v479, 0.0
      %509 = vadd.xlane.f32.xlu0 %v508
      %v510 = vpop.xlane.xlu0 %509
      %v511 = vsel %vm489, %v480, 0.0
      %512 = vadd.xlane.f32.xlu0 %v511
      %v513 = vpop.xlane.xlu0 %512
      %v514 = vsel %vm489, %v481, 0.0
      %515 = vadd.xlane.f32.xlu0 %v514
      %v516 = vpop.xlane.xlu0 %515
      %v517 = vsel %vm489, %v482, 0.0
      %518 = vadd.xlane.f32.xlu0 %v517
      %v519 = vpop.xlane.xlu0 %518
      %v520 = vsel %vm489, %v483, 0.0
      %521 = vadd.xlane.f32.xlu0 %v520
      %v522 = vpop.xlane.xlu0 %521
      %v523 = vsel %vm489, %v484, 0.0
      %524 = vadd.xlane.f32.xlu0 %v523
      %v525 = vpop.xlane.xlu0 %524
      %v526 = vsel %vm489, %v485, 0.0
      %527 = vadd.xlane.f32.xlu0 %v526
      %v528 = vpop.xlane.xlu0 %527
      %v529 = vsel %vm489, %v486, 0.0
      %530 = vadd.xlane.f32.xlu0 %v529
      %v531 = vpop.xlane.xlu0 %530
      %v532 = vsel %vm489, %v487, 0.0
      %533 = vadd.xlane.f32.xlu0 %v532
      %v534 = vpop.xlane.xlu0 %533
      %v535 = vsel %vm489, %v488, 0.0
      %536 = vadd.xlane.f32.xlu0 %v535
      %v537 = vpop.xlane.xlu0 %536
      %v538 = vld [vmem:[#allocation2] sm:$0x1]
      %v540 = vlaneseq
      %v541 = vshrl.u32 %v540, 7
      %v542 = vsub.s32 0, %v541
      %v543 = vrot.slane %v538, %v542
      %v545 = vadd.f32 %v492, %v543
      %v546 = vadd.f32 %v495, %v543
      %v547 = vadd.f32 %v498, %v543
      %v548 = vadd.f32 %v501, %v543
      %v549 = vadd.f32 %v504, %v543
      %v550 = vadd.f32 %v507, %v543
      %v551 = vadd.f32 %v510, %v543
      %v552 = vadd.f32 %v513, %v543
      %v553 = vadd.f32 %v516, %v543
      %v554 = vadd.f32 %v519, %v543
      %v555 = vadd.f32 %v522, %v543
      %v556 = vadd.f32 %v525, %v543
      %v557 = vadd.f32 %v528, %v543
      %v558 = vadd.f32 %v531, %v543
      %v559 = vadd.f32 %v534, %v543
      %v560 = vadd.f32 %v537, %v543
      %v561 = vmax.f32 %v545, 0.0
      %v562 = vmax.f32 %v546, 0.0
      %v563 = vmax.f32 %v547, 0.0
      %v564 = vmax.f32 %v548, 0.0
      %v565 = vmax.f32 %v549, 0.0
      %v566 = vmax.f32 %v550, 0.0
      %v567 = vmax.f32 %v551, 0.0
      %v568 = vmax.f32 %v552, 0.0
      %v569 = vmax.f32 %v553, 0.0
      %v570 = vmax.f32 %v554, 0.0
      %v571 = vmax.f32 %v555, 0.0
      %v572 = vmax.f32 %v556, 0.0
      %v573 = vmax.f32 %v557, 0.0
      %v574 = vmax.f32 %v558, 0.0
      %v575 = vmax.f32 %v559, 0.0
      %v576 = vmax.f32 %v560, 0.0
      %vm577 = vcmask 7168
      %578 = vst.msk [vmem:[%s228] sm:$0xff] %vm577, %v561
      %579 = vst.msk [vmem:[%s228 + $0x8] sm:$0xff] %vm577, %v562
      %580 = vst.msk [vmem:[%s228 + $0x10] sm:$0xff] %vm577, %v563
      %581 = vst.msk [vmem:[%s228 + $0x18] sm:$0xff] %vm577, %v564
      %582 = vst.msk [vmem:[%s228 + $0x20] sm:$0xff] %vm577, %v565
      %583 = vst.msk [vmem:[%s228 + $0x28] sm:$0xff] %vm577, %v566
      %584 = vst.msk [vmem:[%s228 + $0x30] sm:$0xff] %vm577, %v567
      %585 = vst.msk [vmem:[%s228 + $0x38] sm:$0xff] %vm577, %v568
      %586 = vst.msk [vmem:[%s228 + $0x40] sm:$0xff] %vm577, %v569
      %587 = vst.msk [vmem:[%s228 + $0x48] sm:$0xff] %vm577, %v570
      %588 = vst.msk [vmem:[%s228 + $0x50] sm:$0xff] %vm577, %v571
      %589 = vst.msk [vmem:[%s228 + $0x58] sm:$0xff] %vm577, %v572
      %590 = vst.msk [vmem:[%s228 + $0x60] sm:$0xff] %vm577, %v573
      %591 = vst.msk [vmem:[%s228 + $0x68] sm:$0xff] %vm577, %v574
      %592 = vst.msk [vmem:[%s228 + $0x70] sm:$0xff] %vm577, %v575
      %593 = vst.msk [vmem:[%s228 + $0x78] sm:$0xff] %vm577, %v576
      %s594 = smul.u32 16, %s18
      %p595 = scmp.lt.s32.totalorder %s594, 31
      %s596 = scalar_select %p595, %s594, 31
      %s597 = smul.addr %s596, 8
      %s598 = scalar_lea.vmem %s5, %s597
      // Predicated region
      $region41: #{tpu_custom_call.1} parent=39 // pred_check
        %p599 = pneg %p146
      $region42: #{tpu_custom_call.1} parent=39 // pred_check_branch
        %601 = sbr.rel (%p599) target = $region44
      $region43: #{tpu_custom_call.1} parent=39 // pred_region
        %s602 = smul.u32 16, %s18
      $region44: #{tpu_custom_call.1} parent=39 // pred_fallthru
        _
    $region40: #{tpu_custom_call.1} parent=5 // pred_fallthru
      _
    %p603 = scmp.le.s32.totalorder 2, %s13
    // Predicated region
    $region45: #{tpu_custom_call.1} parent=5 // pred_check
      %p604 = pneg %p603
    $region46: #{tpu_custom_call.1} parent=5 // pred_check_branch
      %606 = sbr.rel (%p604) target = $region48
    $region47: #{tpu_custom_call.1} parent=5 // pred_region
      %s607 = ssub.s32 %s13, 2
      // Predicated region
      $region49: #{tpu_custom_call.1} parent=47 // pred_check
        %p608 = pneg %p152
      $region50: #{tpu_custom_call.1} parent=47 // pred_check_branch
        %610 = sbr.rel (%p608) target = $region52
      $region51: #{tpu_custom_call.1} parent=47 // pred_region
        %s611 = smul.u32 16, %s19
        %p612 = scmp.lt.s32.totalorder %s611, 31
        %s613 = scalar_select %p612, %s611, 31
        %s614 = smul.addr %s613, 8
        %s615 = scalar_lea.vmem %s5, %s614
      $region52: #{tpu_custom_call.1} parent=47 // pred_fallthru
        _
    $region48: #{tpu_custom_call.1} parent=5 // pred_fallthru
      _
  $region6: #{tpu_custom_call.1} parent=0 // loop_footer
    %s17 = sadd.s32 1, %s13
  $region7: #{tpu_custom_call.1} parent=0 // loop_footer_branch
    %12 = sbr.rel target = $region3
  $region8: #{tpu_custom_call.1} parent=0 // loop_exit
    _

</llo_original>
